<compile_context>
chip_gen: v7x
topology: tpu7x:2x2x1
jax: 0.10.0
libtpu: 0.0.40
codegen_flags: <defaults>
</compile_context>

<pallas_src>
import functools

import jax
import jax.numpy as jnp
import numpy as np
from jax.experimental import pallas as pl
from jax.experimental.pallas import tpu as pltpu


def _conv_rz_x2_kernel(x_ref, mdn_ref, mup_ref, w_ref, b_ref, a_ref, o_ref, *, nh):
    """Fused dual-branch rezero conv block (single grid step).

    x_ref   : (NH, WC)      row-stacked NHWC input, (W, C) flattened onto lanes
    mdn_ref : (NH, WC)      1.0 everywhere except each image's first row (0.0)
    mup_ref : (NH, WC)      1.0 everywhere except each image's last row (0.0)
    w_ref   : (3*WC, 2*WC)  [kh0; kh1; kh2] banded conv taps, branch-major cols
    b_ref   : (1, 2*WC)     fused bias, tiled over W, branch-major
    a_ref   : (1, 2*WC)     fused rezero alpha, branch-major
    o_ref   : (NH, 2*WC)    lane-dense output
    """
    x2d = x_ref[...]                                        # (NH, WC)
    # kh row alignment on the input side: sublane roll (XLU) + boundary masks.
    # The masks zero each image's edge rows -> exact 'zeros' H-padding, and also
    # kill the roll wrap-around between stacked images.
    x_dn = mdn_ref[...] * pltpu.roll(x2d, 1, 0)             # row h holds x[h-1]
    x_up = mup_ref[...] * pltpu.roll(x2d, nh - 1, 0)        # row h holds x[h+1]
    x_big = jnp.concatenate([x_dn, x2d, x_up], axis=1)      # (NH, 3*WC)

    # Single MXU matmul: both branches' full 3x3 conv (W taps + W zero-padding
    # are folded into the band structure of w_ref).
    conv = jnp.dot(x_big, w_ref[...], preferred_element_type=jnp.float32)
    f = jnp.maximum(conv + b_ref[...], 0.0)                 # bias + relu (VPU)
    res = jnp.concatenate([x2d, x2d], axis=1)               # exact skip path (VPU)
    o_ref[...] = (res + a_ref[...] * f).astype(o_ref.dtype)


def fuse_conv_rz_x2_params(w0, b0, a0, w1, b1, a1, n, c, h, w):
    """One-time HOST-side fusion of the module parameters.

    Returns arrays ready for the kernel:
      w_fused (3*W*C, 2*W*C), b_vec (1, 2*W*C), a_vec (1, 2*W*C),
      mask_dn (N*H, W*C), mask_up (N*H, W*C).
    """
    w0 = np.asarray(w0, np.float32)
    w1 = np.asarray(w1, np.float32)
    kh_n, kw_n = w0.shape[2], w0.shape[3]
    assert kh_n == 3 and kw_n == 3, "kernel built for 3x3 / padding=1 / stride=1"
    wc = w * c
    l = 2 * wc
    nh = n * h

    def bands(wt):
        # OIHW -> (KH, KW, C_in, C_out); banded (W*C, W*C) block per kh.
        wt = np.transpose(wt, (2, 3, 1, 0))
        out = []
        for kh in range(kh_n):
            blk = sum(np.kron(np.eye(w, w, k=1 - kw, dtype=np.float32), wt[kh, kw])
                      for kw in range(kw_n))
            out.append(blk)                                   # (W*C, W*C)
        return out

    bands0, bands1 = bands(w0), bands(w1)
    # Rows: [kh0; kh1; kh2] (matching x_big = [x_dn | x | x_up]);
    # cols: branch-major [branch0 W*C | branch1 W*C].
    w_fused = np.concatenate(
        [np.concatenate([bands0[kh], bands1[kh]], axis=1) for kh in range(kh_n)],
        axis=0).astype(np.float32)                            # (3*W*C, 2*W*C)

    b_vec = np.concatenate([np.tile(np.asarray(b0, np.float32), w),
                            np.tile(np.asarray(b1, np.float32), w)]).reshape(1, l)
    a_vec = np.concatenate([np.full(wc, float(a0), np.float32),
                            np.full(wc, float(a1), np.float32)]).reshape(1, l)

    rows = np.arange(nh) % h
    mask_dn = np.broadcast_to((rows != 0).astype(np.float32)[:, None],
                              (nh, wc)).copy()
    mask_up = np.broadcast_to((rows != h - 1).astype(np.float32)[:, None],
                              (nh, wc)).copy()

    return (jnp.asarray(w_fused), jnp.asarray(b_vec), jnp.asarray(a_vec),
            jnp.asarray(mask_dn), jnp.asarray(mask_up))


@jax.jit
def conv2d_rz_x2(x_nchw, w_fused, b_vec, a_vec, mask_dn, mask_up):
    """x_nchw: (N, C, H, W) f32; fused params from fuse_conv_rz_x2_params.
    Returns (N, 2C, H, W) f32 matching the PyTorch module."""
    n, c, h, w = x_nchw.shape
    wc = w * c
    nh = n * h
    l = 2 * wc
    # Layout invariants the kernel relies on.
    assert w_fused.shape == (3 * wc, l), w_fused.shape
    assert b_vec.shape == (1, l) and a_vec.shape == (1, l)
    assert mask_dn.shape == (nh, wc) and mask_up.shape == (nh, wc)

    # NCHW -> NHWC, row-stack the batch: (N*H, W*C).  Pure layout ops.
    x_flat = jnp.transpose(x_nchw, (0, 2, 3, 1)).reshape(nh, wc)

    kernel = functools.partial(_conv_rz_x2_kernel, nh=nh)

    out_flat = pl.pallas_call(
        kernel,
        out_shape=jax.ShapeDtypeStruct((nh, l), jnp.float32),
        grid=(1,),                                            # single step: whole problem
        in_specs=[
            pl.BlockSpec((nh, wc), lambda i: (0, 0)),         # x (row-stacked)
            pl.BlockSpec((nh, wc), lambda i: (0, 0)),         # down-shift mask
            pl.BlockSpec((nh, wc), lambda i: (0, 0)),         # up-shift mask
            pl.BlockSpec((3 * wc, l), lambda i: (0, 0)),      # fused banded weights
            pl.BlockSpec((1, l), lambda i: (0, 0)),           # fused bias
            pl.BlockSpec((1, l), lambda i: (0, 0)),           # fused alpha
        ],
        out_specs=pl.BlockSpec((nh, l), lambda i: (0, 0)),
        compiler_params=pltpu.CompilerParams(
            dimension_semantics=("arbitrary",)),
    )(x_flat, mask_dn, mask_up, w_fused, b_vec, a_vec)

    # (N*H, 2*W*C) -> (N, H, 2, W, C) -> (N, 2, C, H, W) -> (N, 2C, H, W).
    out = out_flat.reshape(n, h, 2, w, c)
    return jnp.transpose(out, (0, 2, 4, 1, 3)).reshape(n, 2 * c, h, w)


def _reference(x, w0, b0, a0, w1, b1, a1):
    def conv(x, w, b):
        y = jax.lax.conv_general_dilated(
            x, w, window_strides=(1, 1), padding=((1, 1), (1, 1)),
            dimension_numbers=('NCHW', 'OIHW', 'NCHW'))
        return y + b[None, :, None, None]
    y0 = x + a0 * jnp.maximum(conv(x, w0, b0), 0.0)
    y1 = x + a1 * jnp.maximum(conv(x, w1, b1), 0.0)
    return jnp.concatenate([y0, y1], axis=1)


if __name__ == "__main__":
    N, C, H, W = 2, 4, 16, 16
    KH = KW = 3

    key = jax.random.PRNGKey(0)
    kx, k0w, k0b, k1w, k1b = jax.random.split(key, 5)

    x = jax.random.normal(kx, (N, C, H, W), jnp.float32)
    # nn.Conv2d(in_channels, in_channels, 3) -> weight (C, C, 3, 3), bias (C,)
    w0 = jax.random.normal(k0w, (C, C, KH, KW), jnp.float32) * 0.1
    b0 = jax.random.normal(k0b, (C,), jnp.float32) * 0.1
    w1 = jax.random.normal(k1w, (C, C, KH, KW), jnp.float32) * 0.1
    b1 = jax.random.normal(k1b, (C,), jnp.float32) * 0.1
    # Module inits alpha to 0 (rezero); use nonzero values to exercise the path.
    a0, a1 = jnp.float32(0.1), jnp.float32(-0.2)

    # One-time host-side parameter fusion (outside the jitted per-call path).
    fused = fuse_conv_rz_x2_params(w0, b0, a0, w1, b1, a1, N, C, H, W)

    out = conv2d_rz_x2(x, *fused)
    out = jax.block_until_ready(out)

    ref = _reference(x, w0, b0, a0, w1, b1, a1)
    np.testing.assert_allclose(np.asarray(out), np.asarray(ref),
                               rtol=1e-5, atol=1e-5)
    print("KERNEL_OK")
</pallas_src>

<mosaic_0001>
module attributes {stable_mosaic.version = 11 : i64} {
  func.func @_conv_rz_x2_kernel(%arg0: i32, %arg1: memref<32x64xf32, #tpu.memory_space<vmem>>, %arg2: memref<32x64xf32, #tpu.memory_space<vmem>>, %arg3: memref<32x64xf32, #tpu.memory_space<vmem>>, %arg4: memref<192x128xf32, #tpu.memory_space<vmem>>, %arg5: memref<1x128xf32, #tpu.memory_space<vmem>>, %arg6: memref<1x128xf32, #tpu.memory_space<vmem>>, %arg7: memref<32x128xf32, #tpu.memory_space<vmem>>) attributes {dimension_semantics = [#tpu.dimension_semantics<arbitrary>], iteration_bounds = array<i64: 1>, scalar_prefetch = 0 : i64, scratch_operands = 0 : i64, tpu.core_type = #tpu.core_type<tc>, window_params = [{pipeline_mode = #tpu.pipeline_mode<synchronous>, transform_indices = @transform_0, window_bounds = array<i64: 32, 64>}, {pipeline_mode = #tpu.pipeline_mode<synchronous>, transform_indices = @transform_1, window_bounds = array<i64: 32, 64>}, {pipeline_mode = #tpu.pipeline_mode<synchronous>, transform_indices = @transform_2, window_bounds = array<i64: 32, 64>}, {pipeline_mode = #tpu.pipeline_mode<synchronous>, transform_indices = @transform_3, window_bounds = array<i64: 192, 128>}, {pipeline_mode = #tpu.pipeline_mode<synchronous>, transform_indices = @transform_4, window_bounds = array<i64: 1, 128>}, {pipeline_mode = #tpu.pipeline_mode<synchronous>, transform_indices = @transform_5, window_bounds = array<i64: 1, 128>}, {pipeline_mode = #tpu.pipeline_mode<synchronous>, transform_indices = @transform_6, window_bounds = array<i64: 32, 128>}]} {
    %c0 = arith.constant 0 : index
    %c0_0 = arith.constant 0 : index
    %0 = vector.load %arg1[%c0, %c0_0] : memref<32x64xf32, #tpu.memory_space<vmem>>, vector<32x64xf32>
    %c0_1 = arith.constant 0 : index
    %c0_2 = arith.constant 0 : index
    %1 = vector.load %arg2[%c0_1, %c0_2] : memref<32x64xf32, #tpu.memory_space<vmem>>, vector<32x64xf32>
    %c1_i32 = arith.constant 1 : i32
    %2 = tpu.dynamic_rotate %0 by %c1_i32 dim 0 : vector<32x64xf32>, i32 -> vector<32x64xf32>
    %3 = arith.mulf %1, %2 : vector<32x64xf32>
    %c0_3 = arith.constant 0 : index
    %c0_4 = arith.constant 0 : index
    %4 = vector.load %arg3[%c0_3, %c0_4] : memref<32x64xf32, #tpu.memory_space<vmem>>, vector<32x64xf32>
    %c31_i32 = arith.constant 31 : i32
    %5 = tpu.dynamic_rotate %0 by %c31_i32 dim 0 : vector<32x64xf32>, i32 -> vector<32x64xf32>
    %6 = arith.mulf %4, %5 : vector<32x64xf32>
    %7 = tpu.concatenate %3, %0, %6 in 1 : vector<32x64xf32>, vector<32x64xf32>, vector<32x64xf32> -> vector<32x192xf32>
    %c0_5 = arith.constant 0 : index
    %c0_6 = arith.constant 0 : index
    %8 = vector.load %arg4[%c0_5, %c0_6] : memref<192x128xf32, #tpu.memory_space<vmem>>, vector<192x128xf32>
    %cst = arith.constant dense<0.000000e+00> : vector<32x128xf32>
    %9 = tpu.matmul %7, %8, %cst {dimension_numbers = #tpu.dot_dimension_numbers<[1], [0], [0], [1], [0, 0, 1, 1], [], []>} : vector<32x192xf32>, vector<192x128xf32>, vector<32x128xf32> -> vector<32x128xf32>
    %c0_7 = arith.constant 0 : index
    %c0_8 = arith.constant 0 : index
    %10 = vector.load %arg5[%c0_7, %c0_8] : memref<1x128xf32, #tpu.memory_space<vmem>>, vector<1x128xf32>
    %11 = vector.broadcast %10 : vector<1x128xf32> to vector<32x128xf32>
    %12 = arith.addf %9, %11 : vector<32x128xf32>
    %cst_9 = arith.constant 0.000000e+00 : f32
    %13 = vector.broadcast %cst_9 : f32 to vector<32x128xf32>
    %14 = arith.maximumf %12, %13 : vector<32x128xf32>
    %15 = tpu.concatenate %0, %0 in 1 : vector<32x64xf32>, vector<32x64xf32> -> vector<32x128xf32>
    %c0_10 = arith.constant 0 : index
    %c0_11 = arith.constant 0 : index
    %16 = vector.load %arg6[%c0_10, %c0_11] : memref<1x128xf32, #tpu.memory_space<vmem>>, vector<1x128xf32>
    %17 = vector.broadcast %16 : vector<1x128xf32> to vector<32x128xf32>
    %18 = arith.mulf %17, %14 : vector<32x128xf32>
    %19 = arith.addf %15, %18 : vector<32x128xf32>
    %c0_12 = arith.constant 0 : index
    %c0_13 = arith.constant 0 : index
    %20 = vector.load %arg7[%c0_12, %c0_13] : memref<32x128xf32, #tpu.memory_space<vmem>>, vector<32x128xf32>
    tpu.vector_store %arg7[%c0_12, %c0_13], %19 {strides = array<i32>} : memref<32x128xf32, #tpu.memory_space<vmem>>, vector<32x128xf32>,
    return
  }
  func.func @transform_0(%arg0: i32) -> (i32, i32) {
    %c0_i32 = arith.constant 0 : i32
    %c0_i32_0 = arith.constant 0 : i32
    %c0_i32_1 = arith.constant 0 : i32
    return %c0_i32, %c0_i32_0 : i32, i32
  }
  func.func @transform_1(%arg0: i32) -> (i32, i32) {
    %c0_i32 = arith.constant 0 : i32
    %c0_i32_0 = arith.constant 0 : i32
    %c0_i32_1 = arith.constant 0 : i32
    return %c0_i32, %c0_i32_0 : i32, i32
  }
  func.func @transform_2(%arg0: i32) -> (i32, i32) {
    %c0_i32 = arith.constant 0 : i32
    %c0_i32_0 = arith.constant 0 : i32
    %c0_i32_1 = arith.constant 0 : i32
    return %c0_i32, %c0_i32_0 : i32, i32
  }
  func.func @transform_3(%arg0: i32) -> (i32, i32) {
    %c0_i32 = arith.constant 0 : i32
    %c0_i32_0 = arith.constant 0 : i32
    %c0_i32_1 = arith.constant 0 : i32
    return %c0_i32, %c0_i32_0 : i32, i32
  }
  func.func @transform_4(%arg0: i32) -> (i32, i32) {
    %c0_i32 = arith.constant 0 : i32
    %c0_i32_0 = arith.constant 0 : i32
    %c0_i32_1 = arith.constant 0 : i32
    return %c0_i32, %c0_i32_0 : i32, i32
  }
  func.func @transform_5(%arg0: i32) -> (i32, i32) {
    %c0_i32 = arith.constant 0 : i32
    %c0_i32_0 = arith.constant 0 : i32
    %c0_i32_1 = arith.constant 0 : i32
    return %c0_i32, %c0_i32_0 : i32, i32
  }
  func.func @transform_6(%arg0: i32) -> (i32, i32) {
    %c0_i32 = arith.constant 0 : i32
    %c0_i32_0 = arith.constant 0 : i32
    %c0_i32_1 = arith.constant 0 : i32
    return %c0_i32, %c0_i32_0 : i32, i32
  }
}

</mosaic_0001>

<llo_original>
// kernel: conv2d_rz_x2.1
$region0: #{conv2d_rz_x2.1}
  #allocation0 [shape = 'u32[]', space=smem, size = 0x4, offset = 0x4, fixed_abs, tag = 'smem constant byte address 0x4 - core index']
  #allocation1 [shape = 'u32[144,128]{1,0:T(1,128)}', space=vmem, size = 0x12000, scoped, tag = 'internal scratch']
  %s0 = inlined_call_operand.vmem [shape: f32[32,64], index: 0, kind: input, shape index: {}]
  %s1 = inlined_call_operand.vmem [shape: f32[32,64], index: 1, kind: input, shape index: {}]
  %s2 = inlined_call_operand.vmem [shape: f32[32,64], index: 2, kind: input, shape index: {}]
  %s3 = inlined_call_operand.vmem [shape: f32[192,128], index: 3, kind: input, shape index: {}]
  %s4 = inlined_call_operand.vmem [shape: f32[1,128], index: 4, kind: input, shape index: {}]
  %s5 = inlined_call_operand.vmem [shape: f32[1,128], index: 5, kind: input, shape index: {}]
  %s6 = inlined_call_operand.vmem [shape: f32[32,128], index: 6, kind: output, shape index: {}]
  %s7 = sld [smem:[#allocation0]]
  $region34: #{conv2d_rz_x2.1} parent=0
    _
  %s9 = ssub.s32 1, %s7
  %s10 = scalar_select 0, %s9, %s7
  // Predicated region
  $region2: #{conv2d_rz_x2.1} parent=0 // pred_check
    _
  $region3: #{conv2d_rz_x2.1} parent=0 // pred_check_branch
    %12 = sbr.rel (0) target = $region5
  $region4: #{conv2d_rz_x2.1} parent=0 // pred_region
    _
  $region5: #{conv2d_rz_x2.1} parent=0 // pred_fallthru
    _
  // Predicated region
  $region6: #{conv2d_rz_x2.1} parent=0 // pred_check
    _
  $region7: #{conv2d_rz_x2.1} parent=0 // pred_check_branch
    %14 = sbr.rel (0) target = $region9
  $region8: #{conv2d_rz_x2.1} parent=0 // pred_region
    _
  $region9: #{conv2d_rz_x2.1} parent=0 // pred_fallthru
    _
  // Predicated region
  $region10: #{conv2d_rz_x2.1} parent=0 // pred_check
    _
  $region11: #{conv2d_rz_x2.1} parent=0 // pred_check_branch
    %16 = sbr.rel (0) target = $region13
  $region12: #{conv2d_rz_x2.1} parent=0 // pred_region
    _
  $region13: #{conv2d_rz_x2.1} parent=0 // pred_fallthru
    _
  // Predicated region
  $region14: #{conv2d_rz_x2.1} parent=0 // pred_check
    _
  $region15: #{conv2d_rz_x2.1} parent=0 // pred_check_branch
    %18 = sbr.rel (0) target = $region17
  $region16: #{conv2d_rz_x2.1} parent=0 // pred_region
    _
  $region17: #{conv2d_rz_x2.1} parent=0 // pred_fallthru
    _
  // Predicated region
  $region18: #{conv2d_rz_x2.1} parent=0 // pred_check
    _
  $region19: #{conv2d_rz_x2.1} parent=0 // pred_check_branch
    %20 = sbr.rel (0) target = $region21
  $region20: #{conv2d_rz_x2.1} parent=0 // pred_region
    _
  $region21: #{conv2d_rz_x2.1} parent=0 // pred_fallthru
    _
  // Predicated region
  $region22: #{conv2d_rz_x2.1} parent=0 // pred_check
    _
  $region23: #{conv2d_rz_x2.1} parent=0 // pred_check_branch
    %22 = sbr.rel (0) target = $region25
  $region24: #{conv2d_rz_x2.1} parent=0 // pred_region
    _
  $region25: #{conv2d_rz_x2.1} parent=0 // pred_fallthru
    _
  %v23 = vld [vmem:[%s0] sm:$0xff]
  %v24 = vld [vmem:[%s0 + $0x8] sm:$0xff]
  %v25 = vld [vmem:[%s0 + $0x10] sm:$0xff]
  %v26 = vld [vmem:[%s0 + $0x18] sm:$0xff]
  %v27 = vld [vmem:[%s1] sm:$0xff]
  %v28 = vld [vmem:[%s1 + $0x8] sm:$0xff]
  %v29 = vld [vmem:[%s1 + $0x10] sm:$0xff]
  %v30 = vld [vmem:[%s1 + $0x18] sm:$0xff]
  %v31 = vrot.slane %v23, 7
  %v32 = vrot.slane %v24, 7
  %v33 = vrot.slane %v25, 7
  %v34 = vrot.slane %v26, 7
  %v35 = vlaneseq
  %v36 = vshrl.u32 %v35, 7
  %vm37 = vcmp.lt.s32.totalorder %v36, 1
  %v38 = vsel %vm37, %v33, %v34
  %v39 = vsel %vm37, %v32, %v33
  %v40 = vsel %vm37, %v31, %v32
  %v41 = vsel %vm37, %v34, %v31
  %v42 = vmul.f32 %v27, %v41
  %v43 = vmul.f32 %v28, %v40
  %v44 = vmul.f32 %v29, %v39
  %v45 = vmul.f32 %v30, %v38
  %v46 = vld [vmem:[%s2] sm:$0xff]
  %v47 = vld [vmem:[%s2 + $0x8] sm:$0xff]
  %v48 = vld [vmem:[%s2 + $0x10] sm:$0xff]
  %v49 = vld [vmem:[%s2 + $0x18] sm:$0xff]
  %v50 = vrot.slane %v23, 1
  %v51 = vrot.slane %v24, 1
  %v52 = vrot.slane %v25, 1
  %v53 = vrot.slane %v26, 1
  %vm54 = vcmp.lt.s32.totalorder %v36, 7
  %v55 = vsel %vm54, %v52, %v53
  %v56 = vsel %vm54, %v51, %v52
  %v57 = vsel %vm54, %v50, %v51
  %v58 = vsel %vm54, %v53, %v50
  %v59 = vmul.f32 %v46, %v57
  %v60 = vmul.f32 %v47, %v56
  %v61 = vmul.f32 %v48, %v55
  %v62 = vmul.f32 %v49, %v58
  %67 = vrot.lane.b32.xlu0 %v23, 64
  %v68 = vpop.permute.xlu0 %67
  %69 = vrot.lane.b32.xlu0 %v24, 64
  %v70 = vpop.permute.xlu0 %69
  %71 = vrot.lane.b32.xlu0 %v25, 64
  %v72 = vpop.permute.xlu0 %71
  %73 = vrot.lane.b32.xlu0 %v26, 64
  %v74 = vpop.permute.xlu0 %73
  %vm79 = vcmask 523264
  %v80 = vsel %vm79, %v42, %v68
  %v81 = vsel %vm79, %v43, %v70
  %v82 = vsel %vm79, %v44, %v72
  %v83 = vsel %vm79, %v45, %v74
  %v84 = vld [vmem:[%s3] sm:$0xff]
  %v85 = vld [vmem:[%s3 + $0x8] sm:$0xff]
  %v86 = vld [vmem:[%s3 + $0x10] sm:$0xff]
  %v87 = vld [vmem:[%s3 + $0x18] sm:$0xff]
  %v88 = vld [vmem:[%s3 + $0x20] sm:$0xff]
  %v89 = vld [vmem:[%s3 + $0x28] sm:$0xff]
  %v90 = vld [vmem:[%s3 + $0x30] sm:$0xff]
  %v91 = vld [vmem:[%s3 + $0x38] sm:$0xff]
  %v92 = vld [vmem:[%s3 + $0x40] sm:$0xff]
  %v93 = vld [vmem:[%s3 + $0x48] sm:$0xff]
  %v94 = vld [vmem:[%s3 + $0x50] sm:$0xff]
  %v95 = vld [vmem:[%s3 + $0x58] sm:$0xff]
  %v96 = vld [vmem:[%s3 + $0x60] sm:$0xff]
  %v97 = vld [vmem:[%s3 + $0x68] sm:$0xff]
  %v98 = vld [vmem:[%s3 + $0x70] sm:$0xff]
  %v99 = vld [vmem:[%s3 + $0x78] sm:$0xff]
  %v100 = vld [vmem:[%s3 + $0x80] sm:$0xff]
  %v101 = vld [vmem:[%s3 + $0x88] sm:$0xff]
  %v102 = vld [vmem:[%s3 + $0x90] sm:$0xff]
  %v103 = vld [vmem:[%s3 + $0x98] sm:$0xff]
  %v104 = vld [vmem:[%s3 + $0xa0] sm:$0xff]
  %v105 = vld [vmem:[%s3 + $0xa8] sm:$0xff]
  %v106 = vld [vmem:[%s3 + $0xb0] sm:$0xff]
  %v107 = vld [vmem:[%s3 + $0xb8] sm:$0xff]
  %v108 = vld [vmem:[%s4] sm:$0x1]
  %v110 = vlaneseq
  %v111 = vshrl.u32 %v110, 7
  %v112 = vsub.s32 0, %v111
  %v113 = vrot.slane %v108, %v112
  %v116 = vsel %vm79, %v59, 0
  %v119 = vsel %vm79, %v60, 0
  %v122 = vsel %vm79, %v61, 0
  %v125 = vsel %vm79, %v62, 0
  %127 = vmatprep.subr.mxu0 0.0
  %128 = vmatpush1.msra.mxu0 %v84
  %129 = vmatprep.subr.mxu0 0.0
  %130 = vmatpush1.msra.mxu0 %v85
  %131 = vmatprep.subr.mxu0 0.0
  %132 = vmatpush1.msra.mxu0 %v86
  %133 = vmatprep.subr.mxu0 0.0
  %134 = vmatpush1.msra.mxu0 %v87
  %135 = vmatprep.subr.mxu0 0.0
  %136 = vmatpush1.msra.mxu0 %v88
  %137 = vmatprep.subr.mxu0 0.0
  %138 = vmatpush1.msra.mxu0 %v89
  %139 = vmatprep.subr.mxu0 0.0
  %140 = vmatpush1.msra.mxu0 %v90
  %141 = vmatprep.subr.mxu0 0.0
  %142 = vmatpush1.msra.mxu0 %v91
  %143 = vmatprep.subr.mxu0 0.0
  %144 = vmatpush1.msra.mxu0 %v92
  %145 = vmatprep.subr.mxu0 0.0
  %146 = vmatpush1.msra.mxu0 %v93
  %147 = vmatprep.subr.mxu0 0.0
  %148 = vmatpush1.msra.mxu0 %v94
  %149 = vmatprep.subr.mxu0 0.0
  %150 = vmatpush1.msra.mxu0 %v95
  %151 = vmatprep.subr.mxu0 0.0
  %152 = vmatpush1.msra.mxu0 %v96
  %153 = vmatprep.subr.mxu0 0.0
  %154 = vmatpush1.msra.mxu0 %v97
  %155 = vmatprep.subr.mxu0 0.0
  %156 = vmatpush1.msra.mxu0 %v98
  %157 = vmatprep.subr.mxu0 0.0
  %158 = vmatpush1.msra.mxu0 %v99
  %159 = vmatprep.subr.mxu0 0.0
  %160 = vmatpush1.msra.mxu0 %v100
  %161 = vmatprep.subr.mxu0 0.0
  %162 = vmatpush1.msra.mxu0 %v101
  %163 = vmatprep.subr.mxu0 0.0
  %164 = vmatpush1.msra.mxu0 %v102
  %165 = vmatprep.subr.mxu0 0.0
  %166 = vmatpush1.msra.mxu0 %v103
  %167 = vmatprep.subr.mxu0 0.0
  %168 = vmatpush1.msra.mxu0 %v104
  %169 = vmatprep.subr.mxu0 0.0
  %170 = vmatpush1.msra.mxu0 %v105
  %171 = vmatprep.subr.mxu0 0.0
  %172 = vmatpush1.msra.mxu0 %v106
  %173 = vmatprep.subr.mxu0 0.0
  %174 = vmatpush1.msra.mxu0 %v107
  %175 = vmatprep.subr.mxu0 0.0
  %176 = vmatpush1.msra.mxu0 0.0
  %177 = vmatprep.subr.mxu0 0.0
  %178 = vmatpush1.msra.mxu0 0.0
  %179 = vmatprep.subr.mxu0 0.0
  %180 = vmatpush1.msra.mxu0 0.0
  %181 = vmatprep.subr.mxu0 0.0
  %182 = vmatpush1.msra.mxu0 0.0
  %183 = vmatprep.subr.mxu0 0.0
  %184 = vmatpush1.msra.mxu0 0.0
  %185 = vmatprep.subr.mxu0 0.0
  %186 = vmatpush1.msra.mxu0 0.0
  %187 = vmatprep.subr.mxu0 0.0
  %188 = vmatpush1.msra.mxu0 0.0
  %189 = vmatprep.subr.mxu0 0.0
  %190 = vmatpush1.msra.mxu0 0.0
  %191 = vmatprep.mubr.f32.mxu0 %v116
  %192 = vmatmul.mubr.f32.gmra.mrb[0].mxu0 %v80
  %v193 = vpop.f32.mrb[0].mxu0
  %v194 = vadd.f32 %v113, %v193
  %v195 = vpop.f32.mrb[0].mxu0
  %196 = vmatprep.mubr.f32.mxu0 %v119
  %197 = vmatmul.mubr.f32.gmra.mrb[0].mxu0 %v81
  %v198 = vpop.f32.mrb[0].mxu0
  %v199 = vadd.f32 %v113, %v198
  %v200 = vpop.f32.mrb[0].mxu0
  %201 = vmatprep.mubr.f32.mxu0 %v122
  %202 = vmatmul.mubr.f32.gmra.mrb[0].mxu0 %v82
  %v203 = vpop.f32.mrb[0].mxu0
  %v204 = vadd.f32 %v113, %v203
  %v205 = vpop.f32.mrb[0].mxu0
  %206 = vmatprep.mubr.f32.mxu0 %v125
  %207 = vmatmul.mubr.f32.gmra.mrb[0].mxu0 %v83
  %v208 = vpop.f32.mrb[0].mxu0
  %v209 = vadd.f32 %v113, %v208
  %v210 = vpop.f32.mrb[0].mxu0
  %211 = vdwg.mxu0
  %v212 = vmax.f32 %v194, 0.0
  %v213 = vmax.f32 %v199, 0.0
  %v214 = vmax.f32 %v204, 0.0
  %v215 = vmax.f32 %v209, 0.0
  %v216 = vsel %vm79, %v23, %v68
  %v217 = vsel %vm79, %v24, %v70
  %v218 = vsel %vm79, %v25, %v72
  %v219 = vsel %vm79, %v26, %v74
  %v220 = vld [vmem:[%s5] sm:$0x1]
  %v222 = vlaneseq
  %v223 = vshrl.u32 %v222, 7
  %v224 = vsub.s32 0, %v223
  %v225 = vrot.slane %v220, %v224
  %v227 = vmul.f32 %v225, %v212
  %v228 = vmul.f32 %v225, %v213
  %v229 = vmul.f32 %v225, %v214
  %v230 = vmul.f32 %v225, %v215
  %v231 = vadd.f32 %v216, %v227
  %v232 = vadd.f32 %v217, %v228
  %v233 = vadd.f32 %v218, %v229
  %v234 = vadd.f32 %v219, %v230
  %235 = vst [vmem:[%s6] sm:$0xff] %v231
  %236 = vst [vmem:[%s6 + $0x8] sm:$0xff] %v232
  %237 = vst [vmem:[%s6 + $0x10] sm:$0xff] %v233
  %238 = vst [vmem:[%s6 + $0x18] sm:$0xff] %v234
  // Predicated region
  $region26: #{conv2d_rz_x2.1} parent=0 // pred_check
    _
  $region27: #{conv2d_rz_x2.1} parent=0 // pred_check_branch
    %240 = sbr.rel (0) target = $region29
  $region28: #{conv2d_rz_x2.1} parent=0 // pred_region
    _
  $region29: #{conv2d_rz_x2.1} parent=0 // pred_fallthru
    _
  // Predicated region
  $region30: #{conv2d_rz_x2.1} parent=0 // pred_check
    _
  $region31: #{conv2d_rz_x2.1} parent=0 // pred_check_branch
    %242 = sbr.rel (0) target = $region33
  $region32: #{conv2d_rz_x2.1} parent=0 // pred_region
    _
  $region33: #{conv2d_rz_x2.1} parent=0 // pred_fallthru
    _

</llo_original>
